<compile_context>
chip_gen: v5e
topology: v5e:2x2
jax: 0.10.0
libtpu: 0.0.40
codegen_flags: <defaults>
</compile_context>

<pallas_src>
import jax
import jax.numpy as jnp
from jax.experimental import pallas as pl
from jax.experimental.pallas import tpu as pltpu


LANE = 128
BLOCK_BUDGET = 4 << 20      # combined (in + out) bytes per grid step
MIN_GRID_STEPS = 4          # >= 2 steps per TensorCore on v7x megacore
VMEM_FLOOR = 16 << 20
VMEM_CEIL = 96 << 20


# ----------------------------- kernels ------------------------------------


def _scale_copy_kernel(s_ref, x_ref, o_ref):
    # identity branch, batch*channel collapsed on sublanes: o[r,:] = x[r,:]*s[r]
    o_ref[...] = (x_ref[...] * s_ref[...]).astype(o_ref.dtype)


def _make_repeat_kernel(c_in, c_out):
    # repeat / repeat-with-remainder (C_out >= C_in):
    #   o[b, co, :] = x[b, co % c_in, :] * scale[co]
    # group-wise slice writes; no concatenate (no output-sized VMEM temp).
    n = c_out // c_in
    res = c_out % c_in

    def kernel(s_ref, x_ref, o_ref):
        x = x_ref[...]                                   # (tb, c_in, thw)
        s = s_ref[...]                                   # (c_out, 1)
        for g in range(n):                               # static small unroll
            sg = s[g * c_in:(g + 1) * c_in][None, :, :]
            o_ref[:, g * c_in:(g + 1) * c_in, :] = (x * sg).astype(o_ref.dtype)
        if res:
            sg = s[n * c_in:][None, :, :]
            o_ref[:, n * c_in:, :] = (x[:, :res, :] * sg).astype(o_ref.dtype)

    return kernel


def _mix_kernel(w_ref, x_ref, o_ref):
    # mean / mean-with-remainder (C_in > C_out): single dot per grid step,
    # scale (and 1/denom) already folded into W on the host.
    o_ref[...] = jnp.dot(
        w_ref[...], x_ref[...],
        preferred_element_type=jnp.float32,
        precision=jax.lax.Precision.HIGHEST).astype(o_ref.dtype)


# ------------------------- host-side helpers -------------------------------


def _build_mix_matrix(in_channels, out_channels):
    """W (C_out, C_in) replicating torch's mean / mean-with-remainder branches
    (only used when C_in > C_out)."""
    n = in_channels // out_channels
    res = in_channels % out_channels
    W = jnp.zeros((out_channels, in_channels), dtype=jnp.float32)
    rows = jnp.repeat(jnp.arange(out_channels), n)
    cols = (jnp.arange(out_channels)[:, None] * n
            + jnp.arange(n)[None, :]).reshape(-1)
    denom = jnp.where(jnp.arange(out_channels) < res, n + 1, n).astype(jnp.float32)
    W = W.at[rows, cols].set(1.0 / denom[rows])
    if res:
        co = jnp.arange(res)
        W = W.at[co, in_channels - res + co].set(1.0 / (n + 1))
    return W


def _lane_tile(hw_p, max_lanes):
    """Largest multiple-of-128 divisor of hw_p that is <= max_lanes."""
    t = max(LANE, min(hw_p, (max_lanes // LANE) * LANE))
    while t > LANE:
        if hw_p % t == 0:
            return t
        t -= LANE
    return LANE


def _next_smaller_lane_tile(hw_p, thw):
    t = thw - LANE
    while t >= LANE:
        if hw_p % t == 0:
            return t
        t -= LANE
    return LANE


def _row_tile_candidates(rows):
    """Valid sublane-row tiles (multiple-of-8 divisors of rows, plus rows),
    descending."""
    divs = set()
    i = 1
    while i * i <= rows:
        if rows % i == 0:
            divs.add(i)
            divs.add(rows // i)
        i += 1
    cands = {rows} | {d for d in divs if d % 8 == 0}
    return sorted(cands, reverse=True)


def _pick_identity_tiles(rows, hw_p, itemsize):
    row_cands = _row_tile_candidates(rows)
    tr_min = row_cands[-1]
    thw = _lane_tile(hw_p, BLOCK_BUDGET // max(1, 2 * itemsize * tr_min))
    tr = tr_min
    for c in row_cands:
        if 2 * c * thw * itemsize <= BLOCK_BUDGET:
            tr = c
            break

    def steps(tr_, thw_):
        return (rows // tr_) * (hw_p // thw_)

    while steps(tr, thw) < MIN_GRID_STEPS and thw > LANE:
        thw = _next_smaller_lane_tile(hw_p, thw)
    while steps(tr, thw) < MIN_GRID_STEPS:
        smaller = [c for c in row_cands if c < tr]
        if not smaller:
            break
        tr = smaller[0]
    return tr, thw


def _pick_batched_tiles(B, chan_bytes_per_lane, hw_p):
    thw = _lane_tile(hw_p, BLOCK_BUDGET // max(1, chan_bytes_per_lane))
    max_tb = max(1, BLOCK_BUDGET // max(1, chan_bytes_per_lane * thw))
    tb = 1
    for cand in range(min(B, max_tb, 8), 0, -1):
        if B % cand == 0:
            tb = cand
            break

    def steps(tb_, thw_):
        return (B // tb_) * (hw_p // thw_)

    while steps(tb, thw) < MIN_GRID_STEPS and tb > 1:
        nxt = 1
        for cand in range(tb - 1, 0, -1):
            if B % cand == 0:
                nxt = cand
                break
        tb = nxt
    while steps(tb, thw) < MIN_GRID_STEPS and thw > LANE:
        thw = _next_smaller_lane_tile(hw_p, thw)
    return tb, thw


def _pick_mix_lane_tile(B, chan_bytes_per_lane, hw_p):
    thw = _lane_tile(hw_p, BLOCK_BUDGET // max(1, chan_bytes_per_lane))
    while B * (hw_p // thw) < MIN_GRID_STEPS and thw > LANE:
        thw = _next_smaller_lane_tile(hw_p, thw)
    return thw


def _vmem_limit(in_bytes, out_bytes, aux_bytes, extra_bytes=0):
    need = 2 * in_bytes + 2 * out_bytes + aux_bytes + extra_bytes + (4 << 20)
    return int(min(max(need, VMEM_FLOOR), VMEM_CEIL))


# ------------------------------ wrapper ------------------------------------


def channel_residual_forward(x, scale_factor, out_channels):
    """x: (B, C_in, H, W) NCHW; scale_factor: (1, C_out, 1, 1)."""
    B, C_in, H, Wd = x.shape
    C_out = int(out_channels)
    HW = H * Wd
    dtype = x.dtype
    itemsize = jnp.dtype(dtype).itemsize

    hw_p = ((HW + LANE - 1) // LANE) * LANE          # pad lanes to 128-multiple
    x3 = x.reshape(B, C_in, HW)
    if hw_p != HW:
        x3 = jnp.pad(x3, ((0, 0), (0, 0), (0, hw_p - HW)))

    scale = scale_factor.reshape(C_out, 1).astype(jnp.float32)

    rows = B * C_in
    use_2d_identity = (C_in == C_out) and (
        rows % 8 == 0 or 2 * rows * LANE * itemsize <= BLOCK_BUDGET)

    if use_2d_identity:
        # --- identity: (B*C, HWp) 2-D, full sublane packing --------------
        x2 = x3.reshape(rows, hw_p)
        s_rows = jnp.tile(scale.astype(dtype), (B, 1))           # (rows, 1)
        tr, thw = _pick_identity_tiles(rows, hw_p, itemsize)
        grid = (rows // tr, hw_p // thw)
        in_specs = [pl.BlockSpec((tr, 1), lambda r, t: (r, 0)),
                    pl.BlockSpec((tr, thw), lambda r, t: (r, t))]
        out_spec = pl.BlockSpec((tr, thw), lambda r, t: (r, t))
        kernel = _scale_copy_kernel
        operands = (s_rows, x2)
        out_shape = jax.ShapeDtypeStruct((rows, hw_p), dtype)
        in_bytes = tr * thw * itemsize
        out_bytes = tr * thw * itemsize
        aux_bytes = rows * LANE * itemsize
        extra = 0
        flops = B * C_out * hw_p
    elif C_out >= C_in:
        # --- repeat / repeat-with-remainder (also identity fallback) -----
        tb, thw = _pick_batched_tiles(B, (C_in + C_out) * itemsize, hw_p)
        grid = (B // tb, hw_p // thw)
        in_specs = [pl.BlockSpec((C_out, 1), lambda b, t: (0, 0)),
                    pl.BlockSpec((tb, C_in, thw), lambda b, t: (b, 0, t))]
        out_spec = pl.BlockSpec((tb, C_out, thw), lambda b, t: (b, 0, t))
        kernel = _make_repeat_kernel(C_in, C_out)
        operands = (scale.astype(dtype), x3)
        out_shape = jax.ShapeDtypeStruct((B, C_out, hw_p), dtype)
        in_bytes = tb * C_in * thw * itemsize
        out_bytes = tb * C_out * thw * itemsize
        aux_bytes = C_out * LANE * itemsize
        extra = in_bytes                      # per-group product temp margin
        flops = B * C_out * hw_p
    else:
        # --- mix (group mean, optional remainder): one dot per step ------
        w = (_build_mix_matrix(C_in, C_out) * scale).astype(dtype)
        thw = _pick_mix_lane_tile(B, (C_in + C_out) * itemsize, hw_p)
        grid = (B, hw_p // thw)
        in_specs = [pl.BlockSpec((C_out, C_in), lambda b, t: (0, 0)),
                    pl.BlockSpec((None, C_in, thw), lambda b, t: (b, 0, t))]
        out_spec = pl.BlockSpec((None, C_out, thw), lambda b, t: (b, 0, t))
        kernel = _mix_kernel
        operands = (w, x3)
        out_shape = jax.ShapeDtypeStruct((B, C_out, hw_p), dtype)
        in_bytes = C_in * thw * itemsize
        out_bytes = C_out * thw * itemsize
        aux_bytes = C_out * max(C_in, LANE) * itemsize
        extra = C_out * thw * 4 if dtype != jnp.float32 else 0
        flops = 2 * B * C_out * C_in * hw_p

    cost = pl.CostEstimate(
        flops=int(flops),
        transcendentals=0,
        bytes_accessed=int((B * C_in * hw_p + B * C_out * hw_p) * itemsize
                           + aux_bytes))

    out = pl.pallas_call(
        kernel,
        out_shape=out_shape,
        grid_spec=pltpu.PrefetchScalarGridSpec(
            num_scalar_prefetch=0,
            grid=grid,
            in_specs=in_specs,
            out_specs=out_spec),
        compiler_params=pltpu.CompilerParams(
            dimension_semantics=("parallel", "parallel"),
            vmem_limit_bytes=_vmem_limit(in_bytes, out_bytes, aux_bytes, extra)),
        cost_estimate=cost,
    )(*operands)

    out = out.reshape(B, C_out, hw_p)
    if hw_p != HW:
        out = out[:, :, :HW]
    return out.reshape(B, C_out, H, Wd)


# --------------------------- reference ------------------------------------


def _ref_forward(x, scale_factor, out_channels):
    """Direct JAX port of the torch forward, used as correctness reference."""
    B, C_in, H, Wd = x.shape
    s = scale_factor.reshape(1, out_channels, 1, 1)
    if C_in == out_channels:
        return x * s
    elif C_in == out_channels * (C_in // out_channels):
        n = C_in // out_channels
        return x.reshape(B, out_channels, n, H, Wd).mean(axis=2) * s
    elif out_channels == C_in * (out_channels // C_in):
        n = out_channels // C_in
        return jnp.tile(x, (1, n, 1, 1)) * s
    elif C_in > out_channels:
        res = C_in % out_channels
        n = C_in // out_channels
        x_mod = x[:, C_in - res:, :, :]
        xm = x[:, :C_in - res, :, :].reshape(B, out_channels, n, H, Wd).mean(axis=2)
        xm = xm.at[:, :res].set((xm[:, :res] * n + x_mod) / (n + 1))
        return xm * s
    else:
        res = out_channels % C_in
        n = out_channels // C_in
        x_plus = jnp.tile(x, (1, n + 1, 1, 1))
        return x_plus[:, :n * C_in + res, :, :] * s


if __name__ == "__main__":
    key = jax.random.PRNGKey(0)
    kx, ks = jax.random.split(key)

    B, C_in = 2, 4
    # (16,16) is a 128-multiple HW; (15,15) exercises the lane-padding path.
    for (H, W) in ((16, 16), (15, 15)):
        x = jax.random.normal(jax.random.fold_in(kx, H),
                              (B, C_in, H, W), dtype=jnp.float32)
        # exercise all five branches of the torch module
        for out_channels in (4, 2, 8, 3, 6):
            kss = jax.random.fold_in(ks, out_channels)
            scale = jax.random.uniform(
                kss, (1, out_channels, 1, 1), dtype=jnp.float32,
                minval=0.5, maxval=1.5)

            y = channel_residual_forward(x, scale, out_channels)
            y = jax.block_until_ready(y)

            y_ref = _ref_forward(x, scale, out_channels)
            assert y.shape == (B, out_channels, H, W)
            assert jnp.allclose(y, y_ref, rtol=1e-5, atol=1e-5), (
                f"mismatch for H={H} W={W} out_channels={out_channels}")

    print("KERNEL_OK")
</pallas_src>

<mosaic_0001>
module attributes {stable_mosaic.version = 11 : i64} {
  func.func @_scale_copy_kernel(%arg0: i32, %arg1: i32, %arg2: memref<8x1xf32, #tpu.memory_space<vmem>>, %arg3: memref<8x128xf32, #tpu.memory_space<vmem>>, %arg4: memref<8x128xf32, #tpu.memory_space<vmem>>) attributes {dimension_semantics = [#tpu.dimension_semantics<parallel>, #tpu.dimension_semantics<parallel>], iteration_bounds = array<i64: 1, 2>, scalar_prefetch = 0 : i64, scratch_operands = 0 : i64, tpu.core_type = #tpu.core_type<tc>, window_params = [{transform_indices = @transform_0, window_bounds = array<i64: 8, 1>}, {transform_indices = @transform_1, window_bounds = array<i64: 8, 128>}, {transform_indices = @transform_2, window_bounds = array<i64: 8, 128>}]} {
    %c0 = arith.constant 0 : index
    %c0_0 = arith.constant 0 : index
    %0 = vector.load %arg3[%c0, %c0_0] : memref<8x128xf32, #tpu.memory_space<vmem>>, vector<8x128xf32>
    %c0_1 = arith.constant 0 : index
    %c0_2 = arith.constant 0 : index
    %1 = vector.load %arg2[%c0_1, %c0_2] : memref<8x1xf32, #tpu.memory_space<vmem>>, vector<8x1xf32>
    %2 = vector.broadcast %1 : vector<8x1xf32> to vector<8x128xf32>
    %3 = arith.mulf %0, %2 : vector<8x128xf32>
    %c0_3 = arith.constant 0 : index
    %c0_4 = arith.constant 0 : index
    %4 = vector.load %arg4[%c0_3, %c0_4] : memref<8x128xf32, #tpu.memory_space<vmem>>, vector<8x128xf32>
    tpu.vector_store %arg4[%c0_3, %c0_4], %3 {strides = array<i32>} : memref<8x128xf32, #tpu.memory_space<vmem>>, vector<8x128xf32>,
    return
  }
  func.func @transform_0(%arg0: i32, %arg1: i32) -> (i32, i32) {
    %c0_i32 = arith.constant 0 : i32
    %c0_i32_0 = arith.constant 0 : i32
    return %arg0, %c0_i32 : i32, i32
  }
  func.func @transform_1(%arg0: i32, %arg1: i32) -> (i32, i32) {
    %c0_i32 = arith.constant 0 : i32
    return %arg0, %arg1 : i32, i32
  }
  func.func @transform_2(%arg0: i32, %arg1: i32) -> (i32, i32) {
    %c0_i32 = arith.constant 0 : i32
    return %arg0, %arg1 : i32, i32
  }
}

</mosaic_0001>

<llo_original>
// kernel: tpu_custom_call.1
$region0: #{tpu_custom_call.1}
  #allocation0 [shape = 'u32[]', space=smem, size = 0x4, offset = 0x4, fixed_abs, tag = 'smem constant byte address 0x4 - core index']
  #allocation1 [shape = 'u32[72,128]{1,0:T(1,128)}', space=vmem, size = 0x9000, scoped, tag = 'internal scratch']
  %s0 = inlined_call_operand.vmem [shape: f32[8,1], index: 0, kind: input, shape index: {}]
  %s1 = inlined_call_operand.hbm [shape: f32[8,256], index: 1, kind: input, shape index: {}]
  %s2 = inlined_call_operand.hbm [shape: f32[8,256], index: 2, kind: output, shape index: {}]
  %s3 = sld [smem:[#allocation0]]
  $region45: #{tpu_custom_call.1} parent=0
    _
  %s5 = ssub.s32 1, %s3
  %s6 = scalar_select 0, %s5, %s3
  $region1: #{tpu_custom_call.1} parent=0
    #allocation2 [shape = 'u8[8192]{0}', space=vmem, size = 0x2000, scoped, tag = 'input window, operand 1']
    #allocation3 [shape = 's32[2]{0}', space=sflag, size = 0x8, scoped, tag = 'scoped memory for tpu_custom_call.1']
    #allocation4 [shape = 's32[2]{0}', space=sflag, size = 0x8, scoped, tag = 'scoped memory for tpu_custom_call.1']
    #allocation5 [shape = 'u8[8192]{0}', space=vmem, size = 0x2000, scoped, tag = 'output window, operand 0']
    %7 = vsyncpa [#allocation3], 0
    %s8 = scalar_lea.sflag [#allocation3], 1
    %9 = vsyncpa %s8, 0
    %10 = vsyncpa [#allocation4], 0
    %s11 = scalar_lea.sflag [#allocation4], 1
    %12 = vsyncpa %s11, 0
    loop: start=0, step=1, limit=4
    $region2: #{tpu_custom_call.1} parent=1 // loop_pre_header
      _
    $region3: #{tpu_custom_call.1} parent=1 // loop_header
      %s14 = sphi 0, %s18
      %p15 = scmp.ge.s32.totalorder %s14, 4
      %s21 = sphi 0, %s33
      %s22 = sphi 0, %s29
      %s23 = sphi 0, %s21
      %s24 = sphi 0, %s22
      %s25 = sphi 0, %s23
      %s26 = sphi 0, %s24
      %s36 = sphi 0, %s38
      %s39 = sphi 0, %s36
      %s40 = sphi 0, %s39
      %s56 = sphi 0, %s40
      %s64 = sphi 0, %s66
      %s67 = sphi 0, %s64
      %s68 = sphi 0, %s67
      %s84 = sphi 0, %s68
      %s92 = sphi 0, %s94
      %s95 = sphi 0, %s92
      %s96 = sphi 0, %s95
      %s112 = sphi 0, %s96
    $region4: #{tpu_custom_call.1} parent=1 // loop_header_branch
      %17 = sbr.rel (%p15) target = $region8
    $region5: #{tpu_custom_call.1} parent=1 // loop_body
      %s19 = ssub.s32 %s14, 1
      %s20 = ssub.s32 %s14, 2
      %s27 = sadd.s32 1, %s22
      %p28 = scmp.ge.s32.totalorder %s27, 2
      %s29 = scalar_select %p28, 0, %s27
      %s30 = sadd.s32 1, %s21
      %s31 = scalar_select %p28, %s30, %s21
      %p32 = scmp.ge.s32.totalorder %s31, 1
      %s33 = scalar_select %p32, 0, %s31
      %s34 = ssub.s32 %s21, %s33
      %p35 = scmp.eq.s32.totalorder %s34, 0
      %s37 = sadd.s32 %s36, 1
      %s38 = scalar_select %p35, %s36, %s37
      %p41 = pneg %p35
      %p42 = scmp.eq.s32.totalorder %s14, 1
      %p43 = por %p41, %p42
      %p44 = scmp.ne.s32.totalorder %s36, %s39
      %p45 = scmp.eq.s32.totalorder %s14, 0
      %p46 = por %p44, %p45
      %p47 = scmp.ne.s32.totalorder %s36, %s39
      %p48 = scmp.eq.s32.totalorder %s19, 1
      %p49 = por %p47, %p48
      %p50 = scmp.ne.s32.totalorder %s39, %s40
      %p51 = scmp.eq.s32.totalorder %s19, 0
      %p52 = por %p50, %p51
      %p53 = scmp.ne.s32.totalorder %s39, %s40
      %p54 = scmp.eq.s32.totalorder %s20, 1
      %p55 = por %p53, %p54
      %p57 = scmp.ne.s32.totalorder %s40, %s56
      %p58 = scmp.eq.s32.totalorder %s20, 0
      %p59 = por %p57, %p58
      %s60 = ssub.s32 %s21, %s33
      %s61 = ssub.s32 %s22, %s29
      %s62 = sor.u32 %s60, %s61
      %p63 = scmp.eq.s32.totalorder %s62, 0
      %s65 = sadd.s32 %s64, 1
      %s66 = scalar_select %p63, %s64, %s65
      %p69 = pneg %p63
      %p70 = scmp.eq.s32.totalorder %s14, 1
      %p71 = por %p69, %p70
      %p72 = scmp.ne.s32.totalorder %s64, %s67
      %p73 = scmp.eq.s32.totalorder %s14, 0
      %p74 = por %p72, %p73
      %p75 = scmp.ne.s32.totalorder %s64, %s67
      %p76 = scmp.eq.s32.totalorder %s19, 1
      %p77 = por %p75, %p76
      %p78 = scmp.ne.s32.totalorder %s67, %s68
      %p79 = scmp.eq.s32.totalorder %s19, 0
      %p80 = por %p78, %p79
      %p81 = scmp.ne.s32.totalorder %s67, %s68
      %p82 = scmp.eq.s32.totalorder %s20, 1
      %p83 = por %p81, %p82
      %p85 = scmp.ne.s32.totalorder %s68, %s84
      %p86 = scmp.eq.s32.totalorder %s20, 0
      %p87 = por %p85, %p86
      %s88 = ssub.s32 %s21, %s33
      %s89 = ssub.s32 %s22, %s29
      %s90 = sor.u32 %s88, %s89
      %p91 = scmp.eq.s32.totalorder %s90, 0
      %s93 = sadd.s32 %s92, 1
      %s94 = scalar_select %p91, %s92, %s93
      %p97 = pneg %p91
      %p98 = scmp.eq.s32.totalorder %s14, 1
      %p99 = por %p97, %p98
      %p100 = scmp.ne.s32.totalorder %s92, %s95
      %p101 = scmp.eq.s32.totalorder %s14, 0
      %p102 = por %p100, %p101
      %p103 = scmp.ne.s32.totalorder %s92, %s95
      %p104 = scmp.eq.s32.totalorder %s19, 1
      %p105 = por %p103, %p104
      %p106 = scmp.ne.s32.totalorder %s95, %s96
      %p107 = scmp.eq.s32.totalorder %s19, 0
      %p108 = por %p106, %p107
      %p109 = scmp.ne.s32.totalorder %s95, %s96
      %p110 = scmp.eq.s32.totalorder %s20, 1
      %p111 = por %p109, %p110
      %p113 = scmp.ne.s32.totalorder %s96, %s112
      %p114 = scmp.eq.s32.totalorder %s20, 0
      %p115 = por %p113, %p114
      %p116 = scmp.le.s32.totalorder 1, %s14
      %p117 = scmp.lt.s32.totalorder %s14, 3
      %p118 = pnand %p116, %p117
      %p119 = pneg %p118
      // Predicated region
      $region9: #{tpu_custom_call.1} parent=5 // pred_check
        _
      $region10: #{tpu_custom_call.1} parent=5 // pred_check_branch
        %121 = sbr.rel (%p118) target = $region12
      $region11: #{tpu_custom_call.1} parent=5 // pred_region
        %s122 = ssub.s32 %s14, 1
        // Predicated region
        $region13: #{tpu_custom_call.1} parent=11 // pred_check
          %p123 = pneg %p52
        $region14: #{tpu_custom_call.1} parent=11 // pred_check_branch
          %125 = sbr.rel (%p123) target = $region16
        $region15: #{tpu_custom_call.1} parent=11 // pred_region
          %p126 = scmp.lt.s32.totalorder %s23, 0
          %s127 = scalar_select %p126, %s23, 0
          %s128 = smul.addr %s127, 8
          %s129 = scalar_lea.vmem %s0, %s128
        $region16: #{tpu_custom_call.1} parent=11 // pred_fallthru
          _
      $region12: #{tpu_custom_call.1} parent=5 // pred_fallthru
        _
      %p130 = scmp.lt.s32.totalorder %s14, 2
      // Predicated region
      $region17: #{tpu_custom_call.1} parent=5 // pred_check
        %p131 = pneg %p130
      $region18: #{tpu_custom_call.1} parent=5 // pred_check_branch
        %133 = sbr.rel (%p131) target = $region20
      $region19: #{tpu_custom_call.1} parent=5 // pred_region
        // Predicated region
        $region21: #{tpu_custom_call.1} parent=19 // pred_check
          %p134 = pneg %p74
        $region22: #{tpu_custom_call.1} parent=19 // pred_check_branch
          %136 = sbr.rel (%p134) target = $region24
        $region23: #{tpu_custom_call.1} parent=19 // pred_region
          %s137 = sand.u32 %s64, 1
          %s138 = scalar_lea.sflag [#allocation3], %s137
          %s139 = sand.u32 %s64, 1
          %s140 = smul.addr %s139, 8
          %s141 = scalar_lea.vmem [#allocation2], %s140
          %143 = vsyncadd %s138, 0
          %s144 = smul.addr %s21, 2
          %s145 = sadd.s32 %s22, %s144
          %s146 = smul.addr %s145, 8
          %s147 = scalar_lea.hbm %s1, %s146
          %s149 = sshll.u32 %s147, 4
          %s150 = int_to_ptr.hbm [resolvable:$true] %s149
          %s151 = sshll.u32 %s141, 4
          %s152 = int_to_ptr.vmem [resolvable:$true] %s151
          %154 = dma.hbm_to_vmem [thread:$0]  %s150, 128, %s152, %s138
        $region24: #{tpu_custom_call.1} parent=19 // pred_fallthru
          _
      $region20: #{tpu_custom_call.1} parent=5 // pred_fallthru
        _
      %p155 = scmp.le.s32.totalorder 1, %s14
      %p156 = scmp.lt.s32.totalorder %s14, 3
      %p157 = pnand %p155, %p156
      %p158 = pneg %p157
      // Predicated region
      $region25: #{tpu_custom_call.1} parent=5 // pred_check
        _
      $region26: #{tpu_custom_call.1} parent=5 // pred_check_branch
        %160 = sbr.rel (%p157) target = $region28
      $region27: #{tpu_custom_call.1} parent=5 // pred_region
        %s161 = ssub.s32 %s14, 1
        %s162 = sand.u32 %s67, 1
        %s163 = scalar_lea.sflag [#allocation3], %s162
        %s164 = sand.u32 %s67, 1
        %s165 = smul.addr %s164, 8
        %s166 = scalar_lea.vmem [#allocation2], %s165
        // Predicated region
        $region29: #{tpu_custom_call.1} parent=27 // pred_check
          %p167 = pneg %p80
        $region30: #{tpu_custom_call.1} parent=27 // pred_check_branch
          %169 = sbr.rel (%p167) target = $region32
        $region31: #{tpu_custom_call.1} parent=27 // pred_region
          %171 = dma.done %s163, 128
        $region32: #{tpu_custom_call.1} parent=27 // pred_fallthru
          _
        %p172 = scmp.lt.s32.totalorder %s23, 0
        %s173 = scalar_select %p172, %s23, 0
        %s174 = smul.addr %s173, 8
        %s175 = scalar_lea.vmem %s0, %s174
        %p176 = pneg %p52
        %p177 = pneg %p49
        %s178 = sand.u32 %s67, 1
        %s179 = scalar_lea.sflag [#allocation3], %s178
        %s180 = sand.u32 %s67, 1
        %s181 = smul.addr %s180, 8
        %s182 = scalar_lea.vmem [#allocation2], %s181
        %p183 = pneg %p80
        %p184 = pneg %p77
        %p185 = pneg %p108
        %p186 = pneg %p105
        %s187 = sand.u32 %s95, 1
        %s188 = scalar_lea.sflag [#allocation4], %s187
        %s189 = sand.u32 %s95, 1
        %s190 = smul.addr %s189, 8
        %s191 = scalar_lea.vmem [#allocation5], %s190
        %p192 = scmp.lt.s32.totalorder %s23, 0
        %s193 = scalar_select %p192, %s23, 0
        %s194 = smul.addr %s193, 8
        %s195 = scalar_lea.vmem %s0, %s194
        %v196 = vld [vmem:[%s166] sm:$0xff]
        %v197 = vld [vmem:[%s195] sm:$0xff]
        %199 = vset.pattern.permute.xlu0 0
        %200 = vperm.xlu0 %199, %v197
        %v201 = vpop.permute.xlu0 %200
        %v203 = vmul.f32 %v196, %v201
        %204 = vst [vmem:[%s191] sm:$0xff] %v203
        %s205 = sand.u32 %s95, 1
        %s206 = scalar_lea.sflag [#allocation4], %s205
        %s207 = sand.u32 %s95, 1
        %s208 = smul.addr %s207, 8
        %s209 = scalar_lea.vmem [#allocation5], %s208
        // Predicated region
        $region33: #{tpu_custom_call.1} parent=27 // pred_check
          %p210 = pneg %p105
        $region34: #{tpu_custom_call.1} parent=27 // pred_check_branch
          %212 = sbr.rel (%p210) target = $region36
        $region35: #{tpu_custom_call.1} parent=27 // pred_region
          %214 = vsyncadd %s206, 0
          %s215 = smul.addr %s23, 2
          %s216 = sadd.s32 %s24, %s215
          %s217 = smul.addr %s216, 8
          %s218 = scalar_lea.hbm %s2, %s217
          %s220 = sshll.u32 %s209, 4
          %s221 = int_to_ptr.vmem [resolvable:$true] %s220
          %s222 = sshll.u32 %s218, 4
          %s223 = int_to_ptr.hbm [resolvable:$true] %s222
          %225 = dma.vmem_to_hbm [thread:$0]  %s221, 128, %s223, %s206
        $region36: #{tpu_custom_call.1} parent=27 // pred_fallthru
          _
      $region28: #{tpu_custom_call.1} parent=5 // pred_fallthru
        _
      %p226 = scmp.le.s32.totalorder 2, %s14
      // Predicated region
      $region37: #{tpu_custom_call.1} parent=5 // pred_check
        %p227 = pneg %p226
      $region38: #{tpu_custom_call.1} parent=5 // pred_check_branch
        %229 = sbr.rel (%p227) target = $region40
      $region39: #{tpu_custom_call.1} parent=5 // pred_region
        %s230 = ssub.s32 %s14, 2
        // Predicated region
        $region41: #{tpu_custom_call.1} parent=39 // pred_check
          %p231 = pneg %p111
        $region42: #{tpu_custom_call.1} parent=39 // pred_check_branch
          %233 = sbr.rel (%p231) target = $region44
        $region43: #{tpu_custom_call.1} parent=39 // pred_region
          %s234 = sand.u32 %s96, 1
          %s235 = scalar_lea.sflag [#allocation4], %s234
          %s236 = sand.u32 %s96, 1
          %s237 = smul.addr %s236, 8
          %s238 = scalar_lea.vmem [#allocation5], %s237
          %240 = dma.done %s235, 128
        $region44: #{tpu_custom_call.1} parent=39 // pred_fallthru
          _
      $region40: #{tpu_custom_call.1} parent=5 // pred_fallthru
        _
    $region6: #{tpu_custom_call.1} parent=1 // loop_footer
      %s18 = sadd.s32 1, %s14
    $region7: #{tpu_custom_call.1} parent=1 // loop_footer_branch
      %13 = sbr.rel target = $region3
    $region8: #{tpu_custom_call.1} parent=1 // loop_exit
      _
    %241 = vsyncpa [#allocation3], 1
    %s242 = scalar_lea.sflag [#allocation3], 1
    %243 = vsyncpa %s242, 1
    %244 = vsyncpa [#allocation4], 1
    %s245 = scalar_lea.sflag [#allocation4], 1
    %246 = vsyncpa %s245, 1

</llo_original>
